<compile_context>
chip_gen: v7x
topology: tpu7x:2x2x1
jax: 0.10.0
libtpu: 0.0.40
codegen_flags: <defaults>
</compile_context>

<pallas_src>
import jax
import jax.numpy as jnp
from jax import lax
from jax.experimental import pallas as pl
from jax.experimental.pallas import tpu as pltpu

_LANE = 128


def flatten(x):
    """Equivalent of torch `x.view(-1)`: a free, metadata-only row-major flatten."""
    return jnp.reshape(x, (-1,))


def flatten_with_boundary(x):
    """Free flatten, but with an explicit scheduling boundary (no HBM traffic)."""
    return lax.optimization_barrier(jnp.reshape(x, (-1,)))


def _dma_copy_kernel(x_hbm, o_hbm, sem):
    # Single direct HBM -> HBM DMA of the whole (contiguous, lane-dense) buffer.
    # No VMEM staging, no vreg traffic: the DMA engine does the copy.
    cp = pltpu.make_async_copy(x_hbm, o_hbm, sem)
    cp.start()
    cp.wait()


def flatten_pallas(x):
    """Flatten that materializes a NEW flat HBM buffer via one HBM->HBM DMA.

    Use only when an explicit pallas_call boundary *and* a fresh buffer are
    required; otherwise prefer `flatten()` (free view).
    """
    total = x.size
    if total == 0 or total % _LANE != 0:
        # Empty or ragged total: no pad/copy/slice round trips; free view.
        return jnp.reshape(x, (-1,))

    # Lane-dense 2-D view of the flat buffer (metadata-only for contiguous x).
    rows = total // _LANE
    x2d = jnp.reshape(x, (rows, _LANE))

    out2d = pl.pallas_call(
        _dma_copy_kernel,
        out_shape=jax.ShapeDtypeStruct((rows, _LANE), x.dtype),
        # Raw HBM refs on both sides: no auto-DMA to VMEM, no pipelining.
        in_specs=[pl.BlockSpec(memory_space=pl.ANY)],
        out_specs=pl.BlockSpec(memory_space=pl.ANY),
        scratch_shapes=[pltpu.SemaphoreType.DMA],
        # NOTE: deliberately NO input_output_aliases — the point of this path
        # is a materialized new buffer; aliasing + copy would be reading and
        # rewriting the same HBM bytes (pure wasted bandwidth).
    )(x2d)

    return jnp.reshape(out2d, (-1,))


if __name__ == "__main__":
    key = jax.random.PRNGKey(0)
    # Small NCHW input consistent with the module's usage in a perceptual loss.
    x = jax.random.normal(key, (2, 4, 16, 16), dtype=jnp.float32)

    ref = jnp.reshape(x, (-1,))          # torch .view(-1) semantics (row-major)
    y_fast = flatten(x)                  # recommended free-view path
    y_bound = flatten_with_boundary(x)   # free view + op boundary
    y_kernel = flatten_pallas(x)         # explicit HBM->HBM DMA copy path
    jax.block_until_ready(y_kernel)

    assert y_kernel.shape == (2 * 4 * 16 * 16,), y_kernel.shape
    assert y_kernel.dtype == x.dtype
    assert bool(jnp.all(y_kernel == ref))
    assert bool(jnp.all(y_fast == ref))
    assert bool(jnp.all(y_bound == ref))

    print("KERNEL_OK")
</pallas_src>

<mosaic_0001>
module attributes {stable_mosaic.version = 11 : i64} {
  func.func @_dma_copy_kernel(%arg0: memref<16x128xf32, #tpu.memory_space<any>>, %arg1: memref<16x128xf32, #tpu.memory_space<any>>, %arg2: memref<!tpu.dma_semaphore, #tpu.memory_space<semaphore_mem>>) attributes {dimension_semantics = [], scalar_prefetch = 0 : i64, scratch_operands = 1 : i64, tpu.core_type = #tpu.core_type<tc>} {
    tpu.enqueue_dma source(%arg0 : memref<16x128xf32, #tpu.memory_space<any>>) target(%arg1 : memref<16x128xf32, #tpu.memory_space<any>>) target_semaphore(%arg2 : memref<!tpu.dma_semaphore, #tpu.memory_space<semaphore_mem>>)
    tpu.wait_dma2 semaphore(%arg2 : memref<!tpu.dma_semaphore, #tpu.memory_space<semaphore_mem>>) src(%arg0 : memref<16x128xf32, #tpu.memory_space<any>>) dst(%arg1 : memref<16x128xf32, #tpu.memory_space<any>>)
    return
  }
}

</mosaic_0001>

<llo_original>
// kernel: tpu_custom_call.1
$region0: #{tpu_custom_call.1}
  #allocation0 [shape = 'u32[]', space=smem, size = 0x4, offset = 0x4, fixed_abs, tag = 'smem constant byte address 0x4 - core index']
  #allocation1 [shape = 'u32[144,128]{1,0:T(1,128)}', space=vmem, size = 0x12000, scoped, tag = 'internal scratch']
  #allocation2 [shape = 's32[1]{0}', space=sflag, size = 0x4, scoped, tag = 'scratch operand']
  #allocation3 [shape = 's32[]', space=sflag, size = 0x4, offset = 0, fixed_abs, tag = 'sflag constant byte address 0x0 - dummy sync flag']
  #allocation4 [shape = 'u32[0]{0}', space=smem, size = 0, offset = 0, fixed_abs, tag = 'smem constant byte address 0x0 - null']
  %s0 = inlined_call_operand.hbm [shape: f32[16,128], index: 0, kind: input, shape index: {}]
  %s1 = inlined_call_operand.hbm [shape: f32[16,128], index: 1, kind: output, shape index: {}]
  %s2 = sld [smem:[#allocation0]]
  $region2: #{tpu_custom_call.1} parent=0
    _
  %s4 = ssub.s32 1, %s2
  %s5 = scalar_select 0, %s4, %s2
  %s7 = sshll.u32 1, 14
  %s8 = sxor.u32 4294967295, %s7
  %s11 = sshll.u32 3, 24
  %s12 = sxor.u32 4294967295, %s11
  %s13 = sand.u32 0, %s12
  %s15 = sor.u32 %s13, 0
  %18 = dma.general %s0, 256, %s1, [#allocation2], [#allocation3], [#allocation4], %s15, 0
  %s19 = smul.u32 16, 1
  %s20 = sshll.u32 %s19, 4
  %21 = dma.done [#allocation2], %s20
  %22 = vsyncmov [#allocation2]
  %s23 = vpop.sfrf %22
  %p24 = scmp.eq.s32.totalorder %s23, 0
  %p25 = pneg %p24
  %27 = shalt.err (%p25)

</llo_original>
